<compile_context>
chip_gen: v7x
topology: tpu7x:2x2x1
jax: 0.10.0
libtpu: 0.0.40
codegen_flags: <defaults>
</compile_context>

<pallas_src>
import jax
import jax.numpy as jnp
from jax.experimental import pallas as pl
from jax.experimental.pallas import tpu as pltpu


def _round_up(x: int, m: int) -> int:
    return ((x + m - 1) // m) * m


def mlp_kernel(x_ref, w1_ref, b1_ref, w2_ref, b2_ref, o_ref):
    # Cast x to the weight dtype so bf16 params take the native-MXU fast path
    # (no-op for the default f32 params); accumulation is f32 either way.
    x = x_ref[...].astype(w1_ref.dtype)
    h = jnp.dot(x, w1_ref[...], preferred_element_type=jnp.float32)
    h = jnp.maximum(h + b1_ref[...], 0.0)            # (TB, H) + (1, H), f32 epilogue
    o = jnp.dot(h.astype(w2_ref.dtype), w2_ref[...],
                preferred_element_type=jnp.float32)  # (TB, A)
    o_ref[...] = (o + b2_ref[...]).astype(o_ref.dtype)


def _choose_batch_tile(B: int, tb_max: int = 1024) -> int:
    if B < 256:
        # Latency-bound regime: one grid step, block covers the full batch
        # (full-array dims are always legal block dims, no padding needed).
        return B
    # Throughput regime: >= 2 grid steps so the ("parallel",) batch axis is
    # split across both TensorCores on v7x; cap the tile so the pipeline can
    # overlap x-load / out-store with compute.  Tile must be a multiple of 8.
    tb = min(tb_max, (B + 1) // 2)
    return _round_up(tb, 8)


def mlp_forward(x, w1, b1, w2, b2, *, tb_max=1024):
    """y = relu(x @ W1 + b1) @ W2 + b2.  x: (B, D), W1: (D, H), W2: (H, A)."""
    B, D = x.shape
    H = w1.shape[1]
    A = w2.shape[1]

    TB = _choose_batch_tile(B, tb_max)
    grid = (pl.cdiv(B, TB),)

    x_bytes = jnp.dtype(x.dtype).itemsize
    w_bytes = jnp.dtype(w1.dtype).itemsize
    cost = pl.CostEstimate(
        flops=2 * B * (D * H + H * A),
        transcendentals=0,
        bytes_accessed=(B * D * x_bytes
                        + (D * H + H + H * A + A) * w_bytes
                        + B * A * x_bytes),
    )

    return pl.pallas_call(
        mlp_kernel,
        out_shape=jax.ShapeDtypeStruct((B, A), x.dtype),
        grid_spec=pltpu.PrefetchScalarGridSpec(
            num_scalar_prefetch=0,
            grid=grid,
            in_specs=[
                pl.BlockSpec((TB, D), lambda i: (i, 0)),   # x tile, pipelined
                pl.BlockSpec((D, H), lambda i: (0, 0)),    # W1, VMEM-resident
                pl.BlockSpec((1, H), lambda i: (0, 0)),    # b1, VMEM-resident
                pl.BlockSpec((H, A), lambda i: (0, 0)),    # W2, VMEM-resident
                pl.BlockSpec((1, A), lambda i: (0, 0)),    # b2, VMEM-resident
            ],
            out_specs=pl.BlockSpec((TB, A), lambda i: (i, 0)),
        ),
        compiler_params=pltpu.CompilerParams(
            dimension_semantics=("parallel",),  # dual-TC batch split on v7x
        ),
        cost_estimate=cost,
    )(x, w1, b1, w2, b2)


def init_params(key, obs_dim, hidden, num_actions, dtype=jnp.float32):
    """Mirrors PyTorch nn.Linear default init: U(-1/sqrt(fan_in), +1/sqrt(fan_in)).

    Pass dtype=jnp.bfloat16 for the native-MXU bf16 path (the kernel casts x
    to the weight dtype and keeps f32 accumulation)."""
    k1, k2, k3, k4 = jax.random.split(key, 4)
    bound1 = 1.0 / jnp.sqrt(obs_dim)
    bound2 = 1.0 / jnp.sqrt(hidden)
    w1 = jax.random.uniform(k1, (obs_dim, hidden), dtype, -bound1, bound1)
    b1 = jax.random.uniform(k2, (1, hidden), dtype, -bound1, bound1)
    w2 = jax.random.uniform(k3, (hidden, num_actions), dtype, -bound2, bound2)
    b2 = jax.random.uniform(k4, (1, num_actions), dtype, -bound2, bound2)
    return w1, b1, w2, b2


if __name__ == "__main__":
    # TODO(synk): the Adam optimizer / training step of the PyTorch module is
    # not part of the forward pass and is not implemented here.
    obs_dim = 8          # flat observation size (obs_shape = (8,))
    hidden = 256
    num_actions = 4

    key = jax.random.PRNGKey(0)
    kx1, kx2, kx3, kp = jax.random.split(key, 4)
    w1, b1, w2, b2 = init_params(kp, obs_dim, hidden, num_actions)

    def ref_fn(x):
        return jnp.maximum(x @ w1 + b1, 0.0) @ w2 + b2

    # 1) Tiny batch (single-step latency path, zero wrapper ops).
    # 2) Medium non-aligned batch (still a single full-array-block step).
    # 3) Large non-aligned batch (multi-step pipelined path, ragged tail,
    #    dual-TC parallel grid).
    for kx, B in ((kx1, 2), (kx2, 200), (kx3, 1000)):
        x = jax.random.normal(kx, (B, obs_dim), jnp.float32)
        out = jax.block_until_ready(mlp_forward(x, w1, b1, w2, b2))
        assert out.shape == (B, num_actions)
        assert jnp.allclose(out, ref_fn(x), atol=1e-5, rtol=1e-5), f"mismatch at B={B}"

    print("KERNEL_OK")
</pallas_src>

<mosaic_0001>
module attributes {stable_mosaic.version = 11 : i64} {
  func.func @mlp_kernel(%arg0: i32, %arg1: memref<2x8xf32, #tpu.memory_space<vmem>>, %arg2: memref<8x256xf32, #tpu.memory_space<vmem>>, %arg3: memref<1x256xf32, #tpu.memory_space<vmem>>, %arg4: memref<256x4xf32, #tpu.memory_space<vmem>>, %arg5: memref<1x4xf32, #tpu.memory_space<vmem>>, %arg6: memref<2x4xf32, #tpu.memory_space<vmem>>) attributes {dimension_semantics = [#tpu.dimension_semantics<parallel>], iteration_bounds = array<i64: 1>, scalar_prefetch = 0 : i64, scratch_operands = 0 : i64, tpu.core_type = #tpu.core_type<tc>, window_params = [{transform_indices = @transform_0, window_bounds = array<i64: 2, 8>}, {pipeline_mode = #tpu.pipeline_mode<synchronous>, transform_indices = @transform_1, window_bounds = array<i64: 8, 256>}, {pipeline_mode = #tpu.pipeline_mode<synchronous>, transform_indices = @transform_2, window_bounds = array<i64: 1, 256>}, {pipeline_mode = #tpu.pipeline_mode<synchronous>, transform_indices = @transform_3, window_bounds = array<i64: 256, 4>}, {pipeline_mode = #tpu.pipeline_mode<synchronous>, transform_indices = @transform_4, window_bounds = array<i64: 1, 4>}, {transform_indices = @transform_5, window_bounds = array<i64: 2, 4>}]} {
    %c0 = arith.constant 0 : index
    %c0_0 = arith.constant 0 : index
    %0 = vector.load %arg1[%c0, %c0_0] : memref<2x8xf32, #tpu.memory_space<vmem>>, vector<2x8xf32>
    %c0_1 = arith.constant 0 : index
    %c0_2 = arith.constant 0 : index
    %1 = vector.load %arg2[%c0_1, %c0_2] : memref<8x256xf32, #tpu.memory_space<vmem>>, vector<8x256xf32>
    %cst = arith.constant dense<0.000000e+00> : vector<2x256xf32>
    %2 = tpu.matmul %0, %1, %cst {dimension_numbers = #tpu.dot_dimension_numbers<[1], [0], [0], [1], [0, 0, 1, 1], [], []>} : vector<2x8xf32>, vector<8x256xf32>, vector<2x256xf32> -> vector<2x256xf32>
    %c0_3 = arith.constant 0 : index
    %c0_4 = arith.constant 0 : index
    %3 = vector.load %arg3[%c0_3, %c0_4] : memref<1x256xf32, #tpu.memory_space<vmem>>, vector<1x256xf32>
    %4 = vector.broadcast %3 : vector<1x256xf32> to vector<2x256xf32>
    %5 = arith.addf %2, %4 : vector<2x256xf32>
    %cst_5 = arith.constant 0.000000e+00 : f32
    %6 = vector.broadcast %cst_5 : f32 to vector<2x256xf32>
    %7 = arith.maximumf %5, %6 : vector<2x256xf32>
    %c0_6 = arith.constant 0 : index
    %c0_7 = arith.constant 0 : index
    %8 = vector.load %arg4[%c0_6, %c0_7] : memref<256x4xf32, #tpu.memory_space<vmem>>, vector<256x4xf32>
    %cst_8 = arith.constant dense<0.000000e+00> : vector<2x4xf32>
    %9 = tpu.matmul %7, %8, %cst_8 {dimension_numbers = #tpu.dot_dimension_numbers<[1], [0], [0], [1], [0, 0, 1, 1], [], []>} : vector<2x256xf32>, vector<256x4xf32>, vector<2x4xf32> -> vector<2x4xf32>
    %c0_9 = arith.constant 0 : index
    %c0_10 = arith.constant 0 : index
    %10 = vector.load %arg5[%c0_9, %c0_10] : memref<1x4xf32, #tpu.memory_space<vmem>>, vector<1x4xf32>
    %11 = vector.broadcast %10 : vector<1x4xf32> to vector<2x4xf32>
    %12 = arith.addf %9, %11 : vector<2x4xf32>
    %c0_11 = arith.constant 0 : index
    %c0_12 = arith.constant 0 : index
    %13 = vector.load %arg6[%c0_11, %c0_12] : memref<2x4xf32, #tpu.memory_space<vmem>>, vector<2x4xf32>
    tpu.vector_store %arg6[%c0_11, %c0_12], %12 {strides = array<i32>} : memref<2x4xf32, #tpu.memory_space<vmem>>, vector<2x4xf32>,
    return
  }
  func.func @transform_0(%arg0: i32) -> (i32, i32) {
    %c0_i32 = arith.constant 0 : i32
    %c0_i32_0 = arith.constant 0 : i32
    return %arg0, %c0_i32 : i32, i32
  }
  func.func @transform_1(%arg0: i32) -> (i32, i32) {
    %c0_i32 = arith.constant 0 : i32
    %c0_i32_0 = arith.constant 0 : i32
    %c0_i32_1 = arith.constant 0 : i32
    return %c0_i32, %c0_i32_0 : i32, i32
  }
  func.func @transform_2(%arg0: i32) -> (i32, i32) {
    %c0_i32 = arith.constant 0 : i32
    %c0_i32_0 = arith.constant 0 : i32
    %c0_i32_1 = arith.constant 0 : i32
    return %c0_i32, %c0_i32_0 : i32, i32
  }
  func.func @transform_3(%arg0: i32) -> (i32, i32) {
    %c0_i32 = arith.constant 0 : i32
    %c0_i32_0 = arith.constant 0 : i32
    %c0_i32_1 = arith.constant 0 : i32
    return %c0_i32, %c0_i32_0 : i32, i32
  }
  func.func @transform_4(%arg0: i32) -> (i32, i32) {
    %c0_i32 = arith.constant 0 : i32
    %c0_i32_0 = arith.constant 0 : i32
    %c0_i32_1 = arith.constant 0 : i32
    return %c0_i32, %c0_i32_0 : i32, i32
  }
  func.func @transform_5(%arg0: i32) -> (i32, i32) {
    %c0_i32 = arith.constant 0 : i32
    %c0_i32_0 = arith.constant 0 : i32
    return %arg0, %c0_i32 : i32, i32
  }
}

</mosaic_0001>

<llo_original>
// kernel: tpu_custom_call.1
$region0: #{tpu_custom_call.1}
  #allocation0 [shape = 'u32[]', space=smem, size = 0x4, offset = 0x4, fixed_abs, tag = 'smem constant byte address 0x4 - core index']
  #allocation1 [shape = 'u32[144,128]{1,0:T(1,128)}', space=vmem, size = 0x12000, scoped, tag = 'internal scratch']
  %s0 = inlined_call_operand.vmem [shape: f32[2,8], index: 0, kind: input, shape index: {}]
  %s1 = inlined_call_operand.vmem [shape: f32[8,256], index: 1, kind: input, shape index: {}]
  %s2 = inlined_call_operand.vmem [shape: f32[1,256], index: 2, kind: input, shape index: {}]
  %s3 = inlined_call_operand.vmem [shape: f32[256,4], index: 3, kind: input, shape index: {}]
  %s4 = inlined_call_operand.vmem [shape: f32[1,4], index: 4, kind: input, shape index: {}]
  %s5 = inlined_call_operand.hbm [shape: f32[2,4], index: 5, kind: output, shape index: {}]
  %s6 = sld [smem:[#allocation0]]
  $region30: #{tpu_custom_call.1} parent=0
    _
  %s8 = ssub.s32 1, %s6
  %s9 = scalar_select 0, %s8, %s6
  $region1: #{tpu_custom_call.1} parent=0
    #allocation2 [shape = 'u8[1024]{0}', space=vmem, size = 0x400, scoped, tag = 'output window, operand 0, single buffered']
    #allocation3 [shape = 's32[1]{0}', space=sflag, size = 0x4, scoped, tag = 'scoped memory for tpu_custom_call.1']
    %10 = vsyncpa [#allocation3], 0
    // Predicated region
    $region2: #{tpu_custom_call.1} parent=1 // pred_check
      _
    $region3: #{tpu_custom_call.1} parent=1 // pred_check_branch
      %12 = sbr.rel (0) target = $region5
    $region4: #{tpu_custom_call.1} parent=1 // pred_region
      _
    $region5: #{tpu_custom_call.1} parent=1 // pred_fallthru
      _
    // Predicated region
    $region6: #{tpu_custom_call.1} parent=1 // pred_check
      _
    $region7: #{tpu_custom_call.1} parent=1 // pred_check_branch
      %14 = sbr.rel (0) target = $region9
    $region8: #{tpu_custom_call.1} parent=1 // pred_region
      _
    $region9: #{tpu_custom_call.1} parent=1 // pred_fallthru
      _
    // Predicated region
    $region10: #{tpu_custom_call.1} parent=1 // pred_check
      _
    $region11: #{tpu_custom_call.1} parent=1 // pred_check_branch
      %16 = sbr.rel (0) target = $region13
    $region12: #{tpu_custom_call.1} parent=1 // pred_region
      _
    $region13: #{tpu_custom_call.1} parent=1 // pred_fallthru
      _
    // Predicated region
    $region14: #{tpu_custom_call.1} parent=1 // pred_check
      _
    $region15: #{tpu_custom_call.1} parent=1 // pred_check_branch
      %18 = sbr.rel (0) target = $region17
    $region16: #{tpu_custom_call.1} parent=1 // pred_region
      _
    $region17: #{tpu_custom_call.1} parent=1 // pred_fallthru
      _
    // Predicated region
    $region18: #{tpu_custom_call.1} parent=1 // pred_check
      _
    $region19: #{tpu_custom_call.1} parent=1 // pred_check_branch
      %20 = sbr.rel (0) target = $region21
    $region20: #{tpu_custom_call.1} parent=1 // pred_region
      _
    $region21: #{tpu_custom_call.1} parent=1 // pred_fallthru
      _
    %v21 = vld [vmem:[%s0] sm:$0x3]
    %v22 = vld [vmem:[%s1] sm:$0xff]
    %v23 = vld [vmem:[%s1 + $0x8] sm:$0xff]
    %v24 = vld [vmem:[%s2] sm:$0x3]
    %v26 = vlaneseq
    %v27 = vshrl.u32 %v26, 7
    %v28 = vsub.s32 0, %v27
    %v29 = vrot.slane %v24, %v28
    %v30 = vlaneseq
    %v31 = vshrl.u32 %v30, 7
    %v32 = vsub.s32 1, %v31
    %v33 = vrot.slane %v24, %v32
    %vm36 = vcmask 64512
    %v38 = vsel %vm36, %v21, 0
    %40 = vmatprep.subr.mxu0 %v23
    %41 = vmatpush1.msra.mxu0 %v22
    %42 = vmatprep.subr.mxu0 0.0
    %43 = vmatpush1.msra.mxu0 0.0
    %44 = vmatprep.subr.mxu0 0.0
    %45 = vmatpush1.msra.mxu0 0.0
    %46 = vmatprep.subr.mxu0 0.0
    %47 = vmatpush1.msra.mxu0 0.0
    %48 = vmatprep.subr.mxu0 0.0
    %49 = vmatpush1.msra.mxu0 0.0
    %50 = vmatprep.subr.mxu0 0.0
    %51 = vmatpush1.msra.mxu0 0.0
    %52 = vmatprep.subr.mxu0 0.0
    %53 = vmatpush1.msra.mxu0 0.0
    %54 = vmatprep.subr.mxu0 0.0
    %55 = vmatpush1.msra.mxu0 0.0
    %56 = vmatprep.subr.mxu0 0.0
    %57 = vmatpush1.msra.mxu0 0.0
    %58 = vmatprep.subr.mxu0 0.0
    %59 = vmatpush1.msra.mxu0 0.0
    %60 = vmatprep.subr.mxu0 0.0
    %61 = vmatpush1.msra.mxu0 0.0
    %62 = vmatprep.subr.mxu0 0.0
    %63 = vmatpush1.msra.mxu0 0.0
    %64 = vmatprep.subr.mxu0 0.0
    %65 = vmatpush1.msra.mxu0 0.0
    %66 = vmatprep.subr.mxu0 0.0
    %67 = vmatpush1.msra.mxu0 0.0
    %68 = vmatprep.subr.mxu0 0.0
    %69 = vmatpush1.msra.mxu0 0.0
    %70 = vmatprep.subr.mxu0 0.0
    %71 = vmatpush1.msra.mxu0 0.0
    %72 = vmatprep.subr.mxu0 0.0
    %73 = vmatpush1.msra.mxu0 0.0
    %74 = vmatprep.subr.mxu0 0.0
    %75 = vmatpush1.msra.mxu0 0.0
    %76 = vmatprep.subr.mxu0 0.0
    %77 = vmatpush1.msra.mxu0 0.0
    %78 = vmatprep.subr.mxu0 0.0
    %79 = vmatpush1.msra.mxu0 0.0
    %80 = vmatprep.subr.mxu0 0.0
    %81 = vmatpush1.msra.mxu0 0.0
    %82 = vmatprep.subr.mxu0 0.0
    %83 = vmatpush1.msra.mxu0 0.0
    %84 = vmatprep.subr.mxu0 0.0
    %85 = vmatpush1.msra.mxu0 0.0
    %86 = vmatprep.subr.mxu0 0.0
    %87 = vmatpush1.msra.mxu0 0.0
    %88 = vmatprep.subr.mxu0 0.0
    %89 = vmatpush1.msra.mxu0 0.0
    %90 = vmatprep.subr.mxu0 0.0
    %91 = vmatpush1.msra.mxu0 0.0
    %92 = vmatprep.subr.mxu0 0.0
    %93 = vmatpush1.msra.mxu0 0.0
    %94 = vmatprep.subr.mxu0 0.0
    %95 = vmatpush1.msra.mxu0 0.0
    %96 = vmatprep.subr.mxu0 0.0
    %97 = vmatpush1.msra.mxu0 0.0
    %98 = vmatprep.subr.mxu0 0.0
    %99 = vmatpush1.msra.mxu0 0.0
    %100 = vmatprep.subr.mxu0 0.0
    %101 = vmatpush1.msra.mxu0 0.0
    %102 = vmatprep.subr.mxu0 0.0
    %103 = vmatpush1.msra.mxu0 0.0
    %104 = vmatprep.mubr.f32.mxu0 0.0
    %105 = vmatmul.mubr.f32.gmra.mrb[0].mxu0 %v38
    %v106 = vpop.f32.mrb[0].mxu0
    %v107 = vadd.f32 %v29, %v106
    %v108 = vpop.f32.mrb[0].mxu0
    %v109 = vadd.f32 %v33, %v108
    %110 = vdwg.mxu0
    %v111 = vmax.f32 %v107, 0.0
    %v112 = vmax.f32 %v109, 0.0
    %v113 = vld [vmem:[%s3] sm:$0xff]
    %v114 = vld [vmem:[%s3 + $0x8] sm:$0xff]
    %v115 = vld [vmem:[%s3 + $0x10] sm:$0xff]
    %v116 = vld [vmem:[%s3 + $0x18] sm:$0xff]
    %v117 = vld [vmem:[%s3 + $0x20] sm:$0xff]
    %v118 = vld [vmem:[%s3 + $0x28] sm:$0xff]
    %v119 = vld [vmem:[%s3 + $0x30] sm:$0xff]
    %v120 = vld [vmem:[%s3 + $0x38] sm:$0xff]
    %v121 = vld [vmem:[%s3 + $0x40] sm:$0xff]
    %v122 = vld [vmem:[%s3 + $0x48] sm:$0xff]
    %v123 = vld [vmem:[%s3 + $0x50] sm:$0xff]
    %v124 = vld [vmem:[%s3 + $0x58] sm:$0xff]
    %v125 = vld [vmem:[%s3 + $0x60] sm:$0xff]
    %v126 = vld [vmem:[%s3 + $0x68] sm:$0xff]
    %v127 = vld [vmem:[%s3 + $0x70] sm:$0xff]
    %v128 = vld [vmem:[%s3 + $0x78] sm:$0xff]
    %v129 = vld [vmem:[%s3 + $0x80] sm:$0xff]
    %v130 = vld [vmem:[%s3 + $0x88] sm:$0xff]
    %v131 = vld [vmem:[%s3 + $0x90] sm:$0xff]
    %v132 = vld [vmem:[%s3 + $0x98] sm:$0xff]
    %v133 = vld [vmem:[%s3 + $0xa0] sm:$0xff]
    %v134 = vld [vmem:[%s3 + $0xa8] sm:$0xff]
    %v135 = vld [vmem:[%s3 + $0xb0] sm:$0xff]
    %v136 = vld [vmem:[%s3 + $0xb8] sm:$0xff]
    %v137 = vld [vmem:[%s3 + $0xc0] sm:$0xff]
    %v138 = vld [vmem:[%s3 + $0xc8] sm:$0xff]
    %v139 = vld [vmem:[%s3 + $0xd0] sm:$0xff]
    %v140 = vld [vmem:[%s3 + $0xd8] sm:$0xff]
    %v141 = vld [vmem:[%s3 + $0xe0] sm:$0xff]
    %v142 = vld [vmem:[%s3 + $0xe8] sm:$0xff]
    %v143 = vld [vmem:[%s3 + $0xf0] sm:$0xff]
    %v144 = vld [vmem:[%s3 + $0xf8] sm:$0xff]
    %v145 = vld [vmem:[%s4] sm:$0x1]
    %v147 = vlaneseq
    %v148 = vshrl.u32 %v147, 7
    %v149 = vsub.s32 0, %v148
    %v150 = vrot.slane %v145, %v149
    %152 = vmatprep.subr.mxu0 0.0
    %153 = vmatpush1.msra.mxu0 %v113
    %154 = vmatprep.subr.mxu0 0.0
    %155 = vmatpush1.msra.mxu0 %v114
    %156 = vmatprep.subr.mxu0 0.0
    %157 = vmatpush1.msra.mxu0 %v115
    %158 = vmatprep.subr.mxu0 0.0
    %159 = vmatpush1.msra.mxu0 %v116
    %160 = vmatprep.subr.mxu0 0.0
    %161 = vmatpush1.msra.mxu0 %v117
    %162 = vmatprep.subr.mxu0 0.0
    %163 = vmatpush1.msra.mxu0 %v118
    %164 = vmatprep.subr.mxu0 0.0
    %165 = vmatpush1.msra.mxu0 %v119
    %166 = vmatprep.subr.mxu0 0.0
    %167 = vmatpush1.msra.mxu0 %v120
    %168 = vmatprep.subr.mxu0 0.0
    %169 = vmatpush1.msra.mxu0 %v121
    %170 = vmatprep.subr.mxu0 0.0
    %171 = vmatpush1.msra.mxu0 %v122
    %172 = vmatprep.subr.mxu0 0.0
    %173 = vmatpush1.msra.mxu0 %v123
    %174 = vmatprep.subr.mxu0 0.0
    %175 = vmatpush1.msra.mxu0 %v124
    %176 = vmatprep.subr.mxu0 0.0
    %177 = vmatpush1.msra.mxu0 %v125
    %178 = vmatprep.subr.mxu0 0.0
    %179 = vmatpush1.msra.mxu0 %v126
    %180 = vmatprep.subr.mxu0 0.0
    %181 = vmatpush1.msra.mxu0 %v127
    %182 = vmatprep.subr.mxu0 0.0
    %183 = vmatpush1.msra.mxu0 %v128
    %184 = vmatprep.subr.mxu0 0.0
    %185 = vmatpush1.msra.mxu0 %v129
    %186 = vmatprep.subr.mxu0 0.0
    %187 = vmatpush1.msra.mxu0 %v130
    %188 = vmatprep.subr.mxu0 0.0
    %189 = vmatpush1.msra.mxu0 %v131
    %190 = vmatprep.subr.mxu0 0.0
    %191 = vmatpush1.msra.mxu0 %v132
    %192 = vmatprep.subr.mxu0 0.0
    %193 = vmatpush1.msra.mxu0 %v133
    %194 = vmatprep.subr.mxu0 0.0
    %195 = vmatpush1.msra.mxu0 %v134
    %196 = vmatprep.subr.mxu0 0.0
    %197 = vmatpush1.msra.mxu0 %v135
    %198 = vmatprep.subr.mxu0 0.0
    %199 = vmatpush1.msra.mxu0 %v136
    %200 = vmatprep.subr.mxu0 0.0
    %201 = vmatpush1.msra.mxu0 %v137
    %202 = vmatprep.subr.mxu0 0.0
    %203 = vmatpush1.msra.mxu0 %v138
    %204 = vmatprep.subr.mxu0 0.0
    %205 = vmatpush1.msra.mxu0 %v139
    %206 = vmatprep.subr.mxu0 0.0
    %207 = vmatpush1.msra.mxu0 %v140
    %208 = vmatprep.subr.mxu0 0.0
    %209 = vmatpush1.msra.mxu0 %v141
    %210 = vmatprep.subr.mxu0 0.0
    %211 = vmatpush1.msra.mxu0 %v142
    %212 = vmatprep.subr.mxu0 0.0
    %213 = vmatpush1.msra.mxu0 %v143
    %214 = vmatprep.subr.mxu0 0.0
    %215 = vmatpush1.msra.mxu0 %v144
    %216 = vmatprep.mubr.f32.mxu0 %v112
    %217 = vmatmul.mubr.f32.gmra.mrb[0].mxu0 %v111
    %v218 = vpop.f32.mrb[0].mxu0
    %v219 = vadd.f32 %v150, %v218
    %v220 = vpop.f32.mrb[0].mxu0
    %221 = vdwg.mxu0
    %vm222 = vcmask 25600
    %223 = vst.msk [vmem:[#allocation2] sm:$0x3] %vm222, %v219
    // Predicated region
    $region22: #{tpu_custom_call.1} parent=1 // pred_check
      _
    $region23: #{tpu_custom_call.1} parent=1 // pred_check_branch
      %225 = sbr.rel (0) target = $region25
    $region24: #{tpu_custom_call.1} parent=1 // pred_region
      %s227 = ssub.s32 32, 32
      %228 = vsyncadd [#allocation3], %s227
      %s230 = sshll.u32 [#allocation2], 4
      %s231 = int_to_ptr.vmem [resolvable:$true] %s230
      %233 = dma.vmem_to_hbm [thread:$0]  %s231, 32, %s5, [#allocation3]
    $region25: #{tpu_custom_call.1} parent=1 // pred_fallthru
      _
    // Predicated region
    $region26: #{tpu_custom_call.1} parent=1 // pred_check
      _
    $region27: #{tpu_custom_call.1} parent=1 // pred_check_branch
      %235 = sbr.rel (0) target = $region29
    $region28: #{tpu_custom_call.1} parent=1 // pred_region
      %236 = dma.done [#allocation3], 32
    $region29: #{tpu_custom_call.1} parent=1 // pred_fallthru
      _
    %237 = vsyncpa [#allocation3], 1

</llo_original>
